<compile_context>
chip_gen: v7x
topology: tpu7x:2x2x1
jax: 0.10.0
libtpu: 0.0.40
codegen_flags: <defaults>
</compile_context>

<pallas_src>
import functools

import numpy as np
import jax
import jax.numpy as jnp
from jax.experimental import pallas as pl
from jax.experimental.pallas import tpu as pltpu

N_QUBITS = 4
N_LAYERS = 2
DIM = 2 ** N_QUBITS
MAX_BATCH_TILE = 4096  # lane-axis batch tile cap (sweep 2048-8192)


def _round_up(v, m):
    return ((int(v) + m - 1) // m) * m


def _pick_batch_tile(b, max_tile):
    """Clamp the lane tile to the (128-padded) batch; for huge batches keep
    >=4 tiles so multi-TC chips (v7x) can shard the 'parallel' batch axis."""
    max_tile = max(128, (int(max_tile) // 128) * 128)
    padded_min = _round_up(max(int(b), 1), 128)
    if padded_min <= max_tile:
        return padded_min  # small batch: one clamped tile, no wasted columns
    tile = max(1024, _round_up(pl.cdiv(padded_min, 4), 128))
    return min(max_tile, tile)


# ----------------------------------------------------------------------------
# Glue: build the StronglyEntanglingLayers unitary (parameter setup, no data).
# ----------------------------------------------------------------------------
def _op_on(gate2, wire, n):
    """Embed a 2x2 op on `wire` into the full 2^n space (wire 0 = MSB)."""
    return np.kron(np.kron(np.eye(2 ** wire), gate2),
                   np.eye(2 ** (n - wire - 1)))


def _rot(phi, theta, omega):
    """PennyLane qml.Rot(phi, theta, omega) = RZ(omega) RY(theta) RZ(phi)."""
    c, s = np.cos(theta / 2.0), np.sin(theta / 2.0)
    return np.array(
        [[np.exp(-0.5j * (phi + omega)) * c, -np.exp(0.5j * (phi - omega)) * s],
         [np.exp(0.5j * (phi - omega)) * s,  np.exp(0.5j * (phi + omega)) * c]],
        dtype=np.complex128)


def build_entangling_unitary(weights, n_qubits):
    """U for qml.StronglyEntanglingLayers(weights) with default CNOT imprimitive."""
    n_layers = weights.shape[0]
    P0 = np.array([[1.0, 0.0], [0.0, 0.0]])
    P1 = np.array([[0.0, 0.0], [0.0, 1.0]])
    X = np.array([[0.0, 1.0], [1.0, 0.0]])
    U = np.eye(2 ** n_qubits, dtype=np.complex128)
    for l in range(n_layers):
        for i in range(n_qubits):
            U = _op_on(_rot(*weights[l, i]), i, n_qubits) @ U
        if n_qubits > 1:
            r = (l % (n_qubits - 1)) + 1  # PennyLane default ranges
            for i in range(n_qubits):
                c, t = i, (i + r) % n_qubits
                cnot = _op_on(P0, c, n_qubits) + _op_on(P1, c, n_qubits) @ _op_on(X, t, n_qubits)
                U = cnot @ U
    return U


# ----------------------------------------------------------------------------
# Pallas kernel: per batch tile (batch on lanes), full quantum forward + head.
# ----------------------------------------------------------------------------
def qcnn_kernel(x_ref, m_ref, w_ref, bias_ref, out_ref, *, n_qubits):
    # x: (n_qubits, BT) angles, batch on the lane axis.
    x = x_ref[...]
    half = 0.5 * x
    c = jnp.cos(half)                                   # (n_qubits, BT)  (EUP)
    s = jnp.sin(half)

    # Product-state magnitudes |psi0_j| built as an explicit Kronecker product:
    # start from the LSB qubit and prepend each qubit as the new MSB via a
    # sublane concat.  Row j carries bits (b0 .. b_{n-1}) MSB-first, matching
    # the unitary's basis ordering.  Total VALU work ~ 2+4+...+DIM row-muls;
    # no bit-table input, no mask arithmetic.
    k = n_qubits - 1
    mag = jnp.concatenate([c[k:k + 1, :], s[k:k + 1, :]], axis=0)      # (2, BT)
    for k in range(n_qubits - 2, -1, -1):
        ck = c[k:k + 1, :]
        sk = s[k:k + 1, :]
        mag = jnp.concatenate([mag * ck, mag * sk], axis=0)
    # mag: (DIM, BT), real -- the RX phase (-i)^popcount is folded into the
    # unitary on the host.

    # Fused real matmul on the MXU: psi = [Re; Im] stacked,
    # (2*DIM, DIM) @ (DIM, BT).  f32 operands kept on purpose: the MXU is
    # essentially idle here, so bf16 would save nothing while costing accuracy
    # headroom.
    psi = jnp.dot(m_ref[...], mag, preferred_element_type=jnp.float32)  # (2*DIM, BT)

    # probs -> PauliZ -> fc head folded into one weight row; the weighted
    # reduction also runs on the MXU instead of VPU/XLU sublane reduce.
    y = jnp.dot(w_ref[...], psi * psi, preferred_element_type=jnp.float32)  # (1, BT)
    out_ref[...] = y + bias_ref[0, 0]


# ----------------------------------------------------------------------------
# Wrapper
# ----------------------------------------------------------------------------
@functools.partial(jax.jit, static_argnames=("max_batch_tile",))
def _qcnn_run(x, m, wrow, bias, *, max_batch_tile):
    b, n_qubits = x.shape
    dim = 2 ** n_qubits

    bt = _pick_batch_tile(b, max_batch_tile)
    padded_b = _round_up(b, bt)

    # Batch on the lane axis.  Single fused transpose+pad (no zeros+scatter
    # round-trip); padded columns hold angle 0 -> finite values, sliced off
    # after the kernel.
    x_t = x.T
    if padded_b != b:
        x_t = jnp.pad(x_t, ((0, 0), (0, padded_b - b)))

    grid = (padded_b // bt,)
    out = pl.pallas_call(
        functools.partial(qcnn_kernel, n_qubits=n_qubits),
        out_shape=jax.ShapeDtypeStruct((1, padded_b), jnp.float32),
        grid=grid,
        in_specs=[
            pl.BlockSpec((n_qubits, bt), lambda i: (0, i)),     # angles
            # Constant operands: grid-invariant index_map -> block stays
            # resident in VMEM, no per-step refetch.
            pl.BlockSpec((2 * dim, dim), lambda i: (0, 0)),     # fused unitary
            pl.BlockSpec((1, 2 * dim), lambda i: (0, 0)),       # folded Z/fc row
            pl.BlockSpec(memory_space=pltpu.MemorySpace.SMEM),  # bias scalar
        ],
        out_specs=pl.BlockSpec((1, bt), lambda i: (0, i)),      # lane-dense out
        compiler_params=pltpu.CompilerParams(dimension_semantics=("parallel",)),
    )(x_t, m, wrow, bias)
    return out[:, :b].T                                          # (B, 1)


def qcnn_forward(x, q_layers, fc_weight, fc_bias, max_batch_tile=MAX_BATCH_TILE):
    """x: [B, n_qubits] f32.  Returns [B, 1] f32."""
    _, n_qubits = x.shape
    dim = 2 ** n_qubits

    # ---- Parameter setup (weights-only glue, done once) ----------------------
    u = build_entangling_unitary(np.asarray(q_layers, dtype=np.float64), n_qubits)
    # Fold the RX product-state phase (-i)^popcount(m) into U:  U' = U @ diag(phase)
    pop = np.array([bin(j).count("1") for j in range(dim)])
    up = u * ((-1j) ** pop)[None, :]
    m_stack = np.concatenate([np.real(up), np.imag(up)], axis=0)          # (2*dim, dim)

    # Fold PauliZ signs and the fc head:  wz[j] = sum_k zsign[j,k] * fc_w[k]
    j_idx = np.arange(dim)[:, None]
    k_idx = np.arange(n_qubits)[None, :]
    zsign = 1.0 - 2.0 * ((j_idx >> (n_qubits - 1 - k_idx)) & 1)           # (dim, n_qubits)
    wz = zsign @ np.asarray(fc_weight, np.float64).reshape(n_qubits, 1)   # (dim, 1)
    wrow = np.concatenate([wz, wz], axis=0).reshape(1, 2 * dim)           # (1, 2*dim)

    m_j = jnp.asarray(m_stack, jnp.float32)
    wrow_j = jnp.asarray(wrow, jnp.float32)
    bias_j = jnp.asarray(fc_bias, jnp.float32).reshape(1, 1)

    return _qcnn_run(jnp.asarray(x, jnp.float32), m_j, wrow_j, bias_j,
                     max_batch_tile=int(max_batch_tile))


# ----------------------------------------------------------------------------
# Pure numpy reference (same math, complex128) for a sanity check.
# ----------------------------------------------------------------------------
def qcnn_reference(x, q_layers, fc_weight, fc_bias):
    x = np.asarray(x, dtype=np.float64)
    b, n = x.shape
    dim = 2 ** n
    u = build_entangling_unitary(np.asarray(q_layers, dtype=np.float64), n)
    psi0 = np.zeros((b, dim), dtype=np.complex128)
    for smp in range(b):
        amp = np.array([1.0 + 0.0j])
        for k in range(n):
            amp = np.kron(amp, np.array([np.cos(x[smp, k] / 2), -1j * np.sin(x[smp, k] / 2)]))
        psi0[smp] = amp
    psi = psi0 @ u.T
    probs = np.abs(psi) ** 2
    j = np.arange(dim)[:, None]
    k = np.arange(n)[None, :]
    zsign = 1.0 - 2.0 * ((j >> (n - 1 - k)) & 1)
    z = probs @ zsign
    return (z @ np.asarray(fc_weight, np.float64).reshape(n, 1)
            + np.asarray(fc_bias, np.float64).reshape(1, 1)).astype(np.float32)


if __name__ == "__main__":
    key = jax.random.PRNGKey(0)
    k_x, k_q, k_w, k_b, k_x2 = jax.random.split(key, 5)

    # Deterministic "parameters" (shapes from the module __init__).
    q_layers = jax.random.normal(k_q, (N_LAYERS, N_QUBITS, 3), dtype=jnp.float32)
    bound = 1.0 / np.sqrt(N_QUBITS)
    fc_weight = jax.random.uniform(k_w, (1, N_QUBITS), minval=-bound, maxval=bound,
                                   dtype=jnp.float32)
    fc_bias = jax.random.uniform(k_b, (1,), minval=-bound, maxval=bound,
                                 dtype=jnp.float32)

    # --- Small batch (tile clamps to 128, grid of 1) --------------------------
    batch = 2
    x = jax.random.normal(k_x, (batch, N_QUBITS), dtype=jnp.float32)
    y = qcnn_forward(x, q_layers, fc_weight, fc_bias)
    y = jax.block_until_ready(y)
    y_ref = qcnn_reference(np.asarray(x), np.asarray(q_layers),
                           np.asarray(fc_weight), np.asarray(fc_bias))
    assert y.shape == (batch, 1)
    assert np.allclose(np.asarray(y), y_ref, atol=1e-2, rtol=1e-2)

    # --- Larger batch, forced small tile cap -> multi-tile grid + padding -----
    batch2 = 300
    x2 = jax.random.normal(k_x2, (batch2, N_QUBITS), dtype=jnp.float32)
    y2 = qcnn_forward(x2, q_layers, fc_weight, fc_bias, max_batch_tile=256)
    y2 = jax.block_until_ready(y2)
    y2_ref = qcnn_reference(np.asarray(x2), np.asarray(q_layers),
                            np.asarray(fc_weight), np.asarray(fc_bias))
    assert y2.shape == (batch2, 1)
    assert np.allclose(np.asarray(y2), y2_ref, atol=1e-2, rtol=1e-2)

    print("KERNEL_OK")
</pallas_src>

<mosaic_0001>
module attributes {stable_mosaic.version = 11 : i64} {
  func.func @qcnn_kernel(%arg0: i32, %arg1: memref<4x128xf32, #tpu.memory_space<vmem>>, %arg2: memref<32x16xf32, #tpu.memory_space<vmem>>, %arg3: memref<1x32xf32, #tpu.memory_space<vmem>>, %arg4: memref<1x1xf32, #tpu.memory_space<smem>>, %arg5: memref<1x128xf32, #tpu.memory_space<vmem>>) attributes {dimension_semantics = [#tpu.dimension_semantics<parallel>], iteration_bounds = array<i64: 1>, scalar_prefetch = 0 : i64, scratch_operands = 0 : i64, tpu.core_type = #tpu.core_type<tc>, window_params = [{transform_indices = @transform_0, window_bounds = array<i64: 4, 128>}, {pipeline_mode = #tpu.pipeline_mode<synchronous>, transform_indices = @transform_1, window_bounds = array<i64: 32, 16>}, {pipeline_mode = #tpu.pipeline_mode<synchronous>, transform_indices = @transform_2, window_bounds = array<i64: 1, 32>}, {transform_indices = @transform_3, window_bounds = array<i64: 1, 1>}, {transform_indices = @transform_4, window_bounds = array<i64: 1, 128>}]} {
    %c0 = arith.constant 0 : index
    %c0_0 = arith.constant 0 : index
    %0 = vector.load %arg1[%c0, %c0_0] : memref<4x128xf32, #tpu.memory_space<vmem>>, vector<4x128xf32>
    %cst = arith.constant 5.000000e-01 : f32
    %1 = vector.broadcast %cst : f32 to vector<4x128xf32>
    %2 = arith.mulf %1, %0 : vector<4x128xf32>
    %3 = math.cos %2 : vector<4x128xf32>
    %4 = math.sin %2 : vector<4x128xf32>
    %5 = vector.extract_strided_slice %3 {offsets = [3, 0], sizes = [1, 128], strides = [1, 1]} : vector<4x128xf32> to vector<1x128xf32>
    %6 = vector.extract_strided_slice %4 {offsets = [3, 0], sizes = [1, 128], strides = [1, 1]} : vector<4x128xf32> to vector<1x128xf32>
    %7 = tpu.concatenate %5, %6 in 0 : vector<1x128xf32>, vector<1x128xf32> -> vector<2x128xf32>
    %8 = vector.extract_strided_slice %3 {offsets = [2, 0], sizes = [1, 128], strides = [1, 1]} : vector<4x128xf32> to vector<1x128xf32>
    %9 = vector.extract_strided_slice %4 {offsets = [2, 0], sizes = [1, 128], strides = [1, 1]} : vector<4x128xf32> to vector<1x128xf32>
    %10 = vector.broadcast %8 : vector<1x128xf32> to vector<2x128xf32>
    %11 = arith.mulf %7, %10 : vector<2x128xf32>
    %12 = vector.broadcast %9 : vector<1x128xf32> to vector<2x128xf32>
    %13 = arith.mulf %7, %12 : vector<2x128xf32>
    %14 = tpu.concatenate %11, %13 in 0 : vector<2x128xf32>, vector<2x128xf32> -> vector<4x128xf32>
    %15 = vector.extract_strided_slice %3 {offsets = [1, 0], sizes = [1, 128], strides = [1, 1]} : vector<4x128xf32> to vector<1x128xf32>
    %16 = vector.extract_strided_slice %4 {offsets = [1, 0], sizes = [1, 128], strides = [1, 1]} : vector<4x128xf32> to vector<1x128xf32>
    %17 = vector.broadcast %15 : vector<1x128xf32> to vector<4x128xf32>
    %18 = arith.mulf %14, %17 : vector<4x128xf32>
    %19 = vector.broadcast %16 : vector<1x128xf32> to vector<4x128xf32>
    %20 = arith.mulf %14, %19 : vector<4x128xf32>
    %21 = tpu.concatenate %18, %20 in 0 : vector<4x128xf32>, vector<4x128xf32> -> vector<8x128xf32>
    %22 = vector.extract_strided_slice %3 {offsets = [0, 0], sizes = [1, 128], strides = [1, 1]} : vector<4x128xf32> to vector<1x128xf32>
    %23 = vector.extract_strided_slice %4 {offsets = [0, 0], sizes = [1, 128], strides = [1, 1]} : vector<4x128xf32> to vector<1x128xf32>
    %24 = vector.broadcast %22 : vector<1x128xf32> to vector<8x128xf32>
    %25 = arith.mulf %21, %24 : vector<8x128xf32>
    %26 = vector.broadcast %23 : vector<1x128xf32> to vector<8x128xf32>
    %27 = arith.mulf %21, %26 : vector<8x128xf32>
    %28 = tpu.concatenate %25, %27 in 0 : vector<8x128xf32>, vector<8x128xf32> -> vector<16x128xf32>
    %c0_1 = arith.constant 0 : index
    %c0_2 = arith.constant 0 : index
    %29 = vector.load %arg2[%c0_1, %c0_2] : memref<32x16xf32, #tpu.memory_space<vmem>>, vector<32x16xf32>
    %cst_3 = arith.constant dense<0.000000e+00> : vector<32x128xf32>
    %30 = tpu.matmul %29, %28, %cst_3 {dimension_numbers = #tpu.dot_dimension_numbers<[1], [0], [0], [1], [0, 0, 1, 1], [], []>} : vector<32x16xf32>, vector<16x128xf32>, vector<32x128xf32> -> vector<32x128xf32>
    %c0_4 = arith.constant 0 : index
    %c0_5 = arith.constant 0 : index
    %31 = vector.load %arg3[%c0_4, %c0_5] : memref<1x32xf32, #tpu.memory_space<vmem>>, vector<1x32xf32>
    %32 = arith.mulf %30, %30 : vector<32x128xf32>
    %cst_6 = arith.constant dense<0.000000e+00> : vector<1x128xf32>
    %33 = tpu.matmul %31, %32, %cst_6 {dimension_numbers = #tpu.dot_dimension_numbers<[1], [0], [0], [1], [0, 0, 1, 1], [], []>} : vector<1x32xf32>, vector<32x128xf32>, vector<1x128xf32> -> vector<1x128xf32>
    %c0_7 = arith.constant 0 : index
    %c0_8 = arith.constant 0 : index
    %34 = memref.load %arg4[%c0_7, %c0_8] : memref<1x1xf32, #tpu.memory_space<smem>>
    %35 = vector.broadcast %34 : f32 to vector<1x128xf32>
    %36 = arith.addf %33, %35 : vector<1x128xf32>
    %c0_9 = arith.constant 0 : index
    %c0_10 = arith.constant 0 : index
    %37 = vector.load %arg5[%c0_9, %c0_10] : memref<1x128xf32, #tpu.memory_space<vmem>>, vector<1x128xf32>
    tpu.vector_store %arg5[%c0_9, %c0_10], %36 {strides = array<i32>} : memref<1x128xf32, #tpu.memory_space<vmem>>, vector<1x128xf32>,
    return
  }
  func.func @transform_0(%arg0: i32) -> (i32, i32) {
    %c0_i32 = arith.constant 0 : i32
    %c0_i32_0 = arith.constant 0 : i32
    return %c0_i32, %arg0 : i32, i32
  }
  func.func @transform_1(%arg0: i32) -> (i32, i32) {
    %c0_i32 = arith.constant 0 : i32
    %c0_i32_0 = arith.constant 0 : i32
    %c0_i32_1 = arith.constant 0 : i32
    return %c0_i32, %c0_i32_0 : i32, i32
  }
  func.func @transform_2(%arg0: i32) -> (i32, i32) {
    %c0_i32 = arith.constant 0 : i32
    %c0_i32_0 = arith.constant 0 : i32
    %c0_i32_1 = arith.constant 0 : i32
    return %c0_i32, %c0_i32_0 : i32, i32
  }
  func.func @transform_3(%arg0: i32) -> (i32, i32) {
    %c0_i32 = arith.constant 0 : i32
    %c0_i32_0 = arith.constant 0 : i32
    %c0_i32_1 = arith.constant 0 : i32
    return %c0_i32, %c0_i32_0 : i32, i32
  }
  func.func @transform_4(%arg0: i32) -> (i32, i32) {
    %c0_i32 = arith.constant 0 : i32
    %c0_i32_0 = arith.constant 0 : i32
    return %c0_i32, %arg0 : i32, i32
  }
}

</mosaic_0001>

<llo_original>
// kernel: _qcnn_run.1
$region0: #{_qcnn_run.1}
  #allocation0 [shape = 'u32[]', space=smem, size = 0x4, offset = 0x4, fixed_abs, tag = 'smem constant byte address 0x4 - core index']
  #allocation1 [shape = 'u32[144,128]{1,0:T(1,128)}', space=vmem, size = 0x12000, scoped, tag = 'internal scratch']
  #allocation2 [shape = 'f32[1,1]{1,0:T(1,128)S(6)}', space=smem, size = 0x200, scoped, tag = 'scoped memory for _qcnn_run.1']
  %s0 = inlined_call_operand.vmem [shape: f32[4,128], index: 0, kind: input, shape index: {}]
  %s1 = inlined_call_operand.vmem [shape: f32[32,16], index: 1, kind: input, shape index: {}]
  %s2 = inlined_call_operand.vmem [shape: f32[1,32], index: 2, kind: input, shape index: {}]
  %s3 = inlined_call_operand.<no memory space> [shape: f32[1,1], index: 3, kind: input, shape index: {}]
  %s4 = inlined_call_operand.vmem [shape: f32[1,128], index: 4, kind: output, shape index: {}]
  %s5 = sld [smem:[#allocation0]]
  $region26: #{_qcnn_run.1} parent=0
    _
  %s7 = ssub.s32 1, %s5
  %s8 = scalar_select 0, %s7, %s5
  %9 = sst [smem:[#allocation2]] %s3
  // Predicated region
  $region2: #{_qcnn_run.1} parent=0 // pred_check
    _
  $region3: #{_qcnn_run.1} parent=0 // pred_check_branch
    %11 = sbr.rel (0) target = $region5
  $region4: #{_qcnn_run.1} parent=0 // pred_region
    _
  $region5: #{_qcnn_run.1} parent=0 // pred_fallthru
    _
  // Predicated region
  $region6: #{_qcnn_run.1} parent=0 // pred_check
    _
  $region7: #{_qcnn_run.1} parent=0 // pred_check_branch
    %13 = sbr.rel (0) target = $region9
  $region8: #{_qcnn_run.1} parent=0 // pred_region
    _
  $region9: #{_qcnn_run.1} parent=0 // pred_fallthru
    _
  // Predicated region
  $region10: #{_qcnn_run.1} parent=0 // pred_check
    _
  $region11: #{_qcnn_run.1} parent=0 // pred_check_branch
    %15 = sbr.rel (0) target = $region13
  $region12: #{_qcnn_run.1} parent=0 // pred_region
    _
  $region13: #{_qcnn_run.1} parent=0 // pred_fallthru
    _
  // Predicated region
  $region14: #{_qcnn_run.1} parent=0 // pred_check
    _
  $region15: #{_qcnn_run.1} parent=0 // pred_check_branch
    %17 = sbr.rel (0) target = $region17
  $region16: #{_qcnn_run.1} parent=0 // pred_region
    _
  $region17: #{_qcnn_run.1} parent=0 // pred_fallthru
    _
  %v18 = vld [vmem:[%s0] sm:$0xf]
  %v19 = vmul.f32 %v18, 0.5
  %v20 = vand.u32 2147483647, %v19
  %vm21 = vcmp.le.f32.partialorder %v20, 0.7853982
  %vm22 = vcmp.lt.s32.totalorder %v19, 0
  %v23 = vand.u32 %v19, 2139095040
  %v24 = vshrl.u32 %v23, 23
  %v25 = vsub.s32 %v24, 127
  %v26 = vand.u32 2147483647, %v19
  %v27 = vand.u32 %v26, 8388607
  %v28 = vor.u32 %v27, 8388608
  %v29 = vsub.s32 0, %v28
  %v30 = vadd.s32 %v25, 1
  %vm31 = vcmp.gt.s32.totalorder %v30, 0
  %v32 = vsel %vm31, %v30, 0
  %v33 = vshrl.u32 %v32, 5
  %v34 = vand.u32 %v32, 31
  %v35 = vsub.s32 32, %v34
  %v36 = vshrl.u32 683565275, %v35
  %v37 = vshll.u32 683565275, %v34
  %v38 = vshrl.u32 2475754826, %v35
  %v39 = vor.u32 %v37, %v38
  %v40 = vshll.u32 2475754826, %v34
  %v41 = vshrl.u32 2131351028, %v35
  %v42 = vor.u32 %v40, %v41
  %v43 = vshll.u32 2131351028, %v34
  %v44 = vshrl.u32 2102212464, %v35
  %v45 = vor.u32 %v43, %v44
  %v46 = vshll.u32 2102212464, %v34
  %v47 = vshrl.u32 920167782, %v35
  %v48 = vor.u32 %v46, %v47
  %v49 = vshll.u32 920167782, %v34
  %v50 = vshrl.u32 1326507024, %v35
  %v51 = vor.u32 %v49, %v50
  %vm52 = vcmp.lt.s32.totalorder %v33, 1
  %vm53 = vcmp.lt.s32.totalorder %v33, 2
  %vm54 = vcmp.lt.s32.totalorder %v33, 3
  %vm55 = vcmp.lt.s32.totalorder %v33, 4
  %v56 = vsel %vm52, %v36, %v39
  %v57 = vsel %vm55, %v45, 2102212464
  %v58 = vsel %vm54, %v42, %v57
  %v59 = vsel %vm53, %v56, %v58
  %v60 = vsel %vm52, %v39, %v42
  %v61 = vsel %vm55, %v48, 920167782
  %v62 = vsel %vm54, %v45, %v61
  %v63 = vsel %vm53, %v60, %v62
  %v64 = vsel %vm52, %v42, %v45
  %v65 = vsel %vm55, %v51, 1326507024
  %v66 = vsel %vm54, %v48, %v65
  %v67 = vsel %vm53, %v64, %v66
  %v68 = vshll.u32 %v28, 8
  %v69 = vmul.u32.u64.compose %v68, %v67
  %v70 = vextract.low.u32 %v69
  %v71 = vextract.high.u32 %v69
  %v72 = vmul.u32.u64.compose %v68, %v63
  %v73 = vextract.low.u32 %v72
  %v74 = vextract.high.u32 %v72
  %v75 = vmul.u32 %v68, %v59
  %v76 = vadd.s32 %v71, %v73
  %vm77 = vc.u32 %v71, %v73
  %v78 = vadd.s32 %v74, 1
  %v79 = vsel %vm77, %v78, %v74
  %v80 = vadd.s32 %v75, %v79
  %v81 = vadd.s32 %v80, 536870912
  %v82 = vshrl.u32 %v81, 30
  %v83 = vshll.u32 %v82, 30
  %v84 = vsub.s32 %v80, %v83
  %vm85 = vcmp.lt.s32.totalorder %v84, 0
  %v86 = vsub.s32 0, %v84
  %v87 = vsel %vm85, %v86, %v84
  %v88 = vclz %v87
  %v89 = vsub.s32 %v88, 2
  %vm90 = vcmp.gt.s32.totalorder 0, %v89
  %v91 = vsel %vm90, 0, %v89
  %v92 = vsub.s32 32, %v91
  %v93 = vshll.u32 %v84, %v91
  %v94 = vshrl.u32 %v76, %v92
  %v95 = vor.u32 %v93, %v94
  %v96 = vsub.s32 4294967266, %v91
  %v97 = vadd.s32 %v96, 127
  %v98 = vshll.u32 %v97, 23
  %v99 = vor.u32 4788187, %v98
  %v100 = vand.u32 2147483647, %v99
  %v102 = vcvt.s32.f32 %v95
  %v103 = vmul.f32 %v102, %v100
  %v104 = vxor.u32 %v103, 2147483648
  %v105 = vsel %vm22, %v104, %v103
  %v106 = vsub.s32 4, %v82
  %v107 = vsel %vm22, %v106, %v82
  %v108 = vsel %vm21, %v19, %v105
  %v109 = vsel %vm21, 0, %v107
  %v110 = vcosq.f32.pop %v108
  %v111 = vsinq.f32.pop %v108
  %vm112 = vweird.f32 %v19
  %v113 = vand.u32 %v109, 3
  %vm114 = vcmp.lt.s32.totalorder %v113, 2
  %vm115 = vcmp.eq.s32.totalorder %v113, 0
  %v116 = vxor.u32 %v111, 2147483648
  %v117 = vsel %vm115, %v110, %v116
  %vm118 = vcmp.eq.s32.totalorder %v113, 2
  %v119 = vxor.u32 %v110, 2147483648
  %v120 = vsel %vm118, %v119, %v111
  %v121 = vsel %vm114, %v117, %v120
  %v122 = vsel %vm112, nan, %v121
  %v123 = vand.u32 2147483647, %v19
  %vm124 = vcmp.le.f32.partialorder %v123, 0.7853982
  %vm125 = vcmp.lt.s32.totalorder %v19, 0
  %v126 = vand.u32 %v19, 2139095040
  %v127 = vshrl.u32 %v126, 23
  %v128 = vsub.s32 %v127, 127
  %v129 = vand.u32 2147483647, %v19
  %v130 = vand.u32 %v129, 8388607
  %v131 = vor.u32 %v130, 8388608
  %v132 = vsub.s32 0, %v131
  %v133 = vadd.s32 %v128, 1
  %vm134 = vcmp.gt.s32.totalorder %v133, 0
  %v135 = vsel %vm134, %v133, 0
  %v136 = vshrl.u32 %v135, 5
  %v137 = vand.u32 %v135, 31
  %v138 = vsub.s32 32, %v137
  %v139 = vshrl.u32 683565275, %v138
  %v140 = vshll.u32 683565275, %v137
  %v141 = vshrl.u32 2475754826, %v138
  %v142 = vor.u32 %v140, %v141
  %v143 = vshll.u32 2475754826, %v137
  %v144 = vshrl.u32 2131351028, %v138
  %v145 = vor.u32 %v143, %v144
  %v146 = vshll.u32 2131351028, %v137
  %v147 = vshrl.u32 2102212464, %v138
  %v148 = vor.u32 %v146, %v147
  %v149 = vshll.u32 2102212464, %v137
  %v150 = vshrl.u32 920167782, %v138
  %v151 = vor.u32 %v149, %v150
  %v152 = vshll.u32 920167782, %v137
  %v153 = vshrl.u32 1326507024, %v138
  %v154 = vor.u32 %v152, %v153
  %vm155 = vcmp.lt.s32.totalorder %v136, 1
  %vm156 = vcmp.lt.s32.totalorder %v136, 2
  %vm157 = vcmp.lt.s32.totalorder %v136, 3
  %vm158 = vcmp.lt.s32.totalorder %v136, 4
  %v159 = vsel %vm155, %v139, %v142
  %v160 = vsel %vm158, %v148, 2102212464
  %v161 = vsel %vm157, %v145, %v160
  %v162 = vsel %vm156, %v159, %v161
  %v163 = vsel %vm155, %v142, %v145
  %v164 = vsel %vm158, %v151, 920167782
  %v165 = vsel %vm157, %v148, %v164
  %v166 = vsel %vm156, %v163, %v165
  %v167 = vsel %vm155, %v145, %v148
  %v168 = vsel %vm158, %v154, 1326507024
  %v169 = vsel %vm157, %v151, %v168
  %v170 = vsel %vm156, %v167, %v169
  %v171 = vshll.u32 %v131, 8
  %v172 = vmul.u32.u64.compose %v171, %v170
  %v173 = vextract.low.u32 %v172
  %v174 = vextract.high.u32 %v172
  %v175 = vmul.u32.u64.compose %v171, %v166
  %v176 = vextract.low.u32 %v175
  %v177 = vextract.high.u32 %v175
  %v178 = vmul.u32 %v171, %v162
  %v179 = vadd.s32 %v174, %v176
  %vm180 = vc.u32 %v174, %v176
  %v181 = vadd.s32 %v177, 1
  %v182 = vsel %vm180, %v181, %v177
  %v183 = vadd.s32 %v178, %v182
  %v184 = vadd.s32 %v183, 536870912
  %v185 = vshrl.u32 %v184, 30
  %v186 = vshll.u32 %v185, 30
  %v187 = vsub.s32 %v183, %v186
  %vm188 = vcmp.lt.s32.totalorder %v187, 0
  %v189 = vsub.s32 0, %v187
  %v190 = vsel %vm188, %v189, %v187
  %v191 = vclz %v190
  %v192 = vsub.s32 %v191, 2
  %vm193 = vcmp.gt.s32.totalorder 0, %v192
  %v194 = vsel %vm193, 0, %v192
  %v195 = vsub.s32 32, %v194
  %v196 = vshll.u32 %v187, %v194
  %v197 = vshrl.u32 %v179, %v195
  %v198 = vor.u32 %v196, %v197
  %v199 = vsub.s32 4294967266, %v194
  %v200 = vadd.s32 %v199, 127
  %v201 = vshll.u32 %v200, 23
  %v202 = vor.u32 4788187, %v201
  %v203 = vand.u32 2147483647, %v202
  %v205 = vcvt.s32.f32 %v198
  %v206 = vmul.f32 %v205, %v203
  %v207 = vxor.u32 %v206, 2147483648
  %v208 = vsel %vm125, %v207, %v206
  %v209 = vsub.s32 4, %v185
  %v210 = vsel %vm125, %v209, %v185
  %v211 = vsel %vm124, %v19, %v208
  %v212 = vsel %vm124, 0, %v210
  %v213 = vcosq.f32.pop %v211
  %v214 = vsinq.f32.pop %v211
  %vm215 = vweird.f32 %v19
  %v216 = vadd.s32 %v212, 3
  %v217 = vand.u32 %v216, 3
  %vm218 = vcmp.lt.s32.totalorder %v217, 2
  %vm219 = vcmp.eq.s32.totalorder %v217, 0
  %v220 = vxor.u32 %v214, 2147483648
  %v221 = vsel %vm219, %v213, %v220
  %vm222 = vcmp.eq.s32.totalorder %v217, 2
  %v223 = vxor.u32 %v213, 2147483648
  %v224 = vsel %vm222, %v223, %v214
  %v225 = vsel %vm218, %v221, %v224
  %v226 = vsel %vm215, nan, %v225
  %v228 = vrot.slane %v122, 3
  %v231 = vrot.slane %v226, 2
  %vm233 = vcmask 1040384
  %v234 = vsel %vm233, %v228, %v231
  %v235 = vlaneseq
  %v236 = vshrl.u32 %v235, 7
  %v237 = vsub.s32 2, %v236
  %v238 = vrot.slane %v122, %v237
  %v239 = vmul.f32 %v234, %v238
  %v240 = vlaneseq
  %v241 = vshrl.u32 %v240, 7
  %v242 = vsub.s32 2, %v241
  %v243 = vrot.slane %v226, %v242
  %v244 = vmul.f32 %v234, %v243
  %v246 = vrot.slane %v244, 6
  %vm248 = vcmask 1041408
  %v249 = vsel %vm248, %v239, %v246
  %v250 = vlaneseq
  %v251 = vshrl.u32 %v250, 7
  %v252 = vsub.s32 1, %v251
  %v253 = vrot.slane %v122, %v252
  %v254 = vmul.f32 %v249, %v253
  %v255 = vlaneseq
  %v256 = vshrl.u32 %v255, 7
  %v257 = vsub.s32 1, %v256
  %v258 = vrot.slane %v226, %v257
  %v259 = vmul.f32 %v249, %v258
  %v261 = vrot.slane %v259, 4
  %vm263 = vcmask 1043456
  %v264 = vsel %vm263, %v254, %v261
  %v265 = vlaneseq
  %v266 = vshrl.u32 %v265, 7
  %v267 = vsub.s32 0, %v266
  %v268 = vrot.slane %v122, %v267
  %v269 = vmul.f32 %v264, %v268
  %v270 = vlaneseq
  %v271 = vshrl.u32 %v270, 7
  %v272 = vsub.s32 0, %v271
  %v273 = vrot.slane %v226, %v272
  %v274 = vmul.f32 %v264, %v273
  %v275 = vld [vmem:[%s1] sm:$0xff]
  %v276 = vld [vmem:[%s1 + $0x8] sm:$0xff]
  %v277 = vld [vmem:[%s1 + $0x10] sm:$0xff]
  %v278 = vld [vmem:[%s1 + $0x18] sm:$0xff]
  %vm279 = vcmask 130048
  %v281 = vsel %vm279, %v275, 0
  %v284 = vsel %vm279, %v276, 0
  %v287 = vsel %vm279, %v277, 0
  %v290 = vsel %vm279, %v278, 0
  %292 = vmatprep.subr.mxu0 0.0
  %293 = vmatpush1.msra.mxu0 %v269
  %294 = vmatprep.subr.mxu0 0.0
  %295 = vmatpush1.msra.mxu0 %v274
  %296 = vmatprep.subr.mxu0 0.0
  %297 = vmatpush1.msra.mxu0 0.0
  %298 = vmatprep.subr.mxu0 0.0
  %299 = vmatpush1.msra.mxu0 0.0
  %300 = vmatprep.subr.mxu0 0.0
  %301 = vmatpush1.msra.mxu0 0.0
  %302 = vmatprep.subr.mxu0 0.0
  %303 = vmatpush1.msra.mxu0 0.0
  %304 = vmatprep.subr.mxu0 0.0
  %305 = vmatpush1.msra.mxu0 0.0
  %306 = vmatprep.subr.mxu0 0.0
  %307 = vmatpush1.msra.mxu0 0.0
  %308 = vmatprep.subr.mxu0 0.0
  %309 = vmatpush1.msra.mxu0 0.0
  %310 = vmatprep.subr.mxu0 0.0
  %311 = vmatpush1.msra.mxu0 0.0
  %312 = vmatprep.subr.mxu0 0.0
  %313 = vmatpush1.msra.mxu0 0.0
  %314 = vmatprep.subr.mxu0 0.0
  %315 = vmatpush1.msra.mxu0 0.0
  %316 = vmatprep.subr.mxu0 0.0
  %317 = vmatpush1.msra.mxu0 0.0
  %318 = vmatprep.subr.mxu0 0.0
  %319 = vmatpush1.msra.mxu0 0.0
  %320 = vmatprep.subr.mxu0 0.0
  %321 = vmatpush1.msra.mxu0 0.0
  %322 = vmatprep.subr.mxu0 0.0
  %323 = vmatpush1.msra.mxu0 0.0
  %324 = vmatprep.subr.mxu0 0.0
  %325 = vmatpush1.msra.mxu0 0.0
  %326 = vmatprep.subr.mxu0 0.0
  %327 = vmatpush1.msra.mxu0 0.0
  %328 = vmatprep.subr.mxu0 0.0
  %329 = vmatpush1.msra.mxu0 0.0
  %330 = vmatprep.subr.mxu0 0.0
  %331 = vmatpush1.msra.mxu0 0.0
  %332 = vmatprep.subr.mxu0 0.0
  %333 = vmatpush1.msra.mxu0 0.0
  %334 = vmatprep.subr.mxu0 0.0
  %335 = vmatpush1.msra.mxu0 0.0
  %336 = vmatprep.subr.mxu0 0.0
  %337 = vmatpush1.msra.mxu0 0.0
  %338 = vmatprep.subr.mxu0 0.0
  %339 = vmatpush1.msra.mxu0 0.0
  %340 = vmatprep.subr.mxu0 0.0
  %341 = vmatpush1.msra.mxu0 0.0
  %342 = vmatprep.subr.mxu0 0.0
  %343 = vmatpush1.msra.mxu0 0.0
  %344 = vmatprep.subr.mxu0 0.0
  %345 = vmatpush1.msra.mxu0 0.0
  %346 = vmatprep.subr.mxu0 0.0
  %347 = vmatpush1.msra.mxu0 0.0
  %348 = vmatprep.subr.mxu0 0.0
  %349 = vmatpush1.msra.mxu0 0.0
  %350 = vmatprep.subr.mxu0 0.0
  %351 = vmatpush1.msra.mxu0 0.0
  %352 = vmatprep.subr.mxu0 0.0
  %353 = vmatpush1.msra.mxu0 0.0
  %354 = vmatprep.subr.mxu0 0.0
  %355 = vmatpush1.msra.mxu0 0.0
  %356 = vmatprep.mubr.f32.mxu0 0.0
  %357 = vmatmul.mubr.f32.gmra.mrb[0].mxu0 %v281
  %v358 = vpop.f32.mrb[0].mxu0
  %v359 = vadd.f32 0.0, %v358
  %v360 = vpop.f32.mrb[0].mxu0
  %361 = vmatprep.mubr.f32.mxu0 0.0
  %362 = vmatmul.mubr.f32.gmra.mrb[0].mxu0 %v284
  %v363 = vpop.f32.mrb[0].mxu0
  %v364 = vadd.f32 0.0, %v363
  %v365 = vpop.f32.mrb[0].mxu0
  %366 = vmatprep.mubr.f32.mxu0 0.0
  %367 = vmatmul.mubr.f32.gmra.mrb[0].mxu0 %v287
  %v368 = vpop.f32.mrb[0].mxu0
  %v369 = vadd.f32 0.0, %v368
  %v370 = vpop.f32.mrb[0].mxu0
  %371 = vmatprep.mubr.f32.mxu0 0.0
  %372 = vmatmul.mubr.f32.gmra.mrb[0].mxu0 %v290
  %v373 = vpop.f32.mrb[0].mxu0
  %v374 = vadd.f32 0.0, %v373
  %v375 = vpop.f32.mrb[0].mxu0
  %376 = vdwg.mxu0
  %v377 = vld [vmem:[%s2] sm:$0x1]
  %v378 = vmul.f32 %v359, %v359
  %v379 = vmul.f32 %v364, %v364
  %v380 = vmul.f32 %v369, %v369
  %v381 = vmul.f32 %v374, %v374
  %s382 = sld [smem:[#allocation2]]
  %v383 = vstv %s382
  %vm384 = vcmask 261120
  %v386 = vsel %vm384, %v377, 0
  %388 = vmatprep.subr.mxu0 0.0
  %389 = vmatpush1.msra.mxu0 %v378
  %390 = vmatprep.subr.mxu0 0.0
  %391 = vmatpush1.msra.mxu0 %v379
  %392 = vmatprep.subr.mxu0 0.0
  %393 = vmatpush1.msra.mxu0 %v380
  %394 = vmatprep.subr.mxu0 0.0
  %395 = vmatpush1.msra.mxu0 %v381
  %396 = vmatprep.subr.mxu0 0.0
  %397 = vmatpush1.msra.mxu0 0.0
  %398 = vmatprep.subr.mxu0 0.0
  %399 = vmatpush1.msra.mxu0 0.0
  %400 = vmatprep.subr.mxu0 0.0
  %401 = vmatpush1.msra.mxu0 0.0
  %402 = vmatprep.subr.mxu0 0.0
  %403 = vmatpush1.msra.mxu0 0.0
  %404 = vmatprep.subr.mxu0 0.0
  %405 = vmatpush1.msra.mxu0 0.0
  %406 = vmatprep.subr.mxu0 0.0
  %407 = vmatpush1.msra.mxu0 0.0
  %408 = vmatprep.subr.mxu0 0.0
  %409 = vmatpush1.msra.mxu0 0.0
  %410 = vmatprep.subr.mxu0 0.0
  %411 = vmatpush1.msra.mxu0 0.0
  %412 = vmatprep.subr.mxu0 0.0
  %413 = vmatpush1.msra.mxu0 0.0
  %414 = vmatprep.subr.mxu0 0.0
  %415 = vmatpush1.msra.mxu0 0.0
  %416 = vmatprep.subr.mxu0 0.0
  %417 = vmatpush1.msra.mxu0 0.0
  %418 = vmatprep.subr.mxu0 0.0
  %419 = vmatpush1.msra.mxu0 0.0
  %420 = vmatprep.subr.mxu0 0.0
  %421 = vmatpush1.msra.mxu0 0.0
  %422 = vmatprep.subr.mxu0 0.0
  %423 = vmatpush1.msra.mxu0 0.0
  %424 = vmatprep.subr.mxu0 0.0
  %425 = vmatpush1.msra.mxu0 0.0
  %426 = vmatprep.subr.mxu0 0.0
  %427 = vmatpush1.msra.mxu0 0.0
  %428 = vmatprep.subr.mxu0 0.0
  %429 = vmatpush1.msra.mxu0 0.0
  %430 = vmatprep.subr.mxu0 0.0
  %431 = vmatpush1.msra.mxu0 0.0
  %432 = vmatprep.subr.mxu0 0.0
  %433 = vmatpush1.msra.mxu0 0.0
  %434 = vmatprep.subr.mxu0 0.0
  %435 = vmatpush1.msra.mxu0 0.0
  %436 = vmatprep.subr.mxu0 0.0
  %437 = vmatpush1.msra.mxu0 0.0
  %438 = vmatprep.subr.mxu0 0.0
  %439 = vmatpush1.msra.mxu0 0.0
  %440 = vmatprep.subr.mxu0 0.0
  %441 = vmatpush1.msra.mxu0 0.0
  %442 = vmatprep.subr.mxu0 0.0
  %443 = vmatpush1.msra.mxu0 0.0
  %444 = vmatprep.subr.mxu0 0.0
  %445 = vmatpush1.msra.mxu0 0.0
  %446 = vmatprep.subr.mxu0 0.0
  %447 = vmatpush1.msra.mxu0 0.0
  %448 = vmatprep.subr.mxu0 0.0
  %449 = vmatpush1.msra.mxu0 0.0
  %450 = vmatprep.subr.mxu0 0.0
  %451 = vmatpush1.msra.mxu0 0.0
  %452 = vmatprep.mubr.f32.mxu0 0.0
  %453 = vmatmul.mubr.f32.gmra.mrb[0].mxu0 %v386
  %v454 = vpop.f32.mrb[0].mxu0
  %v455 = vadd.f32 %v383, %v454
  %v456 = vpop.f32.mrb[0].mxu0
  %457 = vdwg.mxu0
  %458 = vst [vmem:[%s4] sm:$0x1] %v455
  // Predicated region
  $region18: #{_qcnn_run.1} parent=0 // pred_check
    _
  $region19: #{_qcnn_run.1} parent=0 // pred_check_branch
    %460 = sbr.rel (0) target = $region21
  $region20: #{_qcnn_run.1} parent=0 // pred_region
    _
  $region21: #{_qcnn_run.1} parent=0 // pred_fallthru
    _
  // Predicated region
  $region22: #{_qcnn_run.1} parent=0 // pred_check
    _
  $region23: #{_qcnn_run.1} parent=0 // pred_check_branch
    %462 = sbr.rel (0) target = $region25
  $region24: #{_qcnn_run.1} parent=0 // pred_region
    _
  $region25: #{_qcnn_run.1} parent=0 // pred_fallthru
    _

</llo_original>
